<compile_context>
chip_gen: v7x
topology: tpu7x:2x2x1
jax: 0.10.0
libtpu: 0.0.40
codegen_flags: <defaults>
</compile_context>

<pallas_src>
import functools
import math

import jax
import jax.numpy as jnp
from jax.experimental import pallas as pl
from jax.experimental.pallas import tpu as pltpu


# ---------------------------------------------------------------------------
# Kernels
# ---------------------------------------------------------------------------

def _pe_add_kernel(x_ref, pe_ref, o_ref):
    # x_ref : (TS, TB, D) (or (TS, D) for the batch==1 lane-dense path)
    # pe_ref: (TS, 1,  D) (or (TS, D))
    # Natural broadcast over the batch (sublane) axis; stays in x.dtype.
    o_ref[...] = (x_ref[...] + pe_ref[...]).astype(o_ref.dtype)


def _pe_add_dropout_kernel(seed_ref, x_ref, pe_ref, o_ref, *, p, grid_rank):
    # Fused positional add + inverted dropout (training mode) so dropout does not
    # pay its own HBM read+write pass.  TPU hardware PRNG (real TPUs only).
    step = pl.program_id(0)
    if grid_rank == 2:
        step = step * pl.num_programs(1) + pl.program_id(1)
    pltpu.prng_seed(seed_ref[0], step)
    bits = pltpu.bitcast(pltpu.prng_random_bits(x_ref.shape), jnp.uint32)
    # Clamp so p very close to 1 does not overflow to threshold 0 (no dropout).
    threshold = jnp.uint32(min(int(round(p * (2 ** 32))), (2 ** 32) - 1))
    keep = bits >= threshold                               # P(keep) = 1 - p
    y = x_ref[...] + pe_ref[...]                           # stays in x.dtype (no f32 upcast)
    scale = jnp.asarray(1.0 / (1.0 - p), dtype=y.dtype)
    o_ref[...] = jnp.where(keep, y * scale, jnp.zeros_like(y)).astype(o_ref.dtype)


# ---------------------------------------------------------------------------
# PE table (identical math to the torch __init__, robust to odd d_model)
# ---------------------------------------------------------------------------

def make_pe_table(d_model: int, max_len: int = 5000, dtype=jnp.float32):
    position = jnp.arange(max_len, dtype=jnp.float32)[:, None]                 # (L, 1)
    div_term = jnp.exp(
        jnp.arange(0, d_model, 2, dtype=jnp.float32) * (-math.log(10000.0) / d_model)
    )                                                                          # (ceil(D/2),)
    args = position * div_term                                                 # (L, ceil(D/2))
    pe = jnp.zeros((max_len, d_model), dtype=jnp.float32)
    pe = pe.at[:, 0::2].set(jnp.sin(args))
    pe = pe.at[:, 1::2].set(jnp.cos(args)[:, : d_model // 2])
    return pe[:, None, :].astype(dtype)                                        # (L, 1, D)


# ---------------------------------------------------------------------------
# Hardware queries / tiling policy
# ---------------------------------------------------------------------------

def _round_up(a: int, m: int) -> int:
    return (a + m - 1) // m * m


def _sublane_pack(dtype) -> int:
    # Elements packed per sublane group: f32 -> 8, bf16 -> 16, int8/fp8 -> 32.
    bits = jnp.dtype(dtype).itemsize * 8
    return max(8, 256 // bits)


def _vmem_capacity_bytes() -> int:
    try:
        return int(pltpu.get_tpu_info().vmem_capacity_bytes)
    except Exception:
        return 64 << 20  # conservative: v7x per-TensorCore VMEM


def _num_tensorcores() -> int:
    try:
        info = pltpu.get_tpu_info()
        for name in ("num_cores", "core_count", "num_tensorcores", "tensor_cores_per_chip"):
            v = getattr(info, name, None)
            if v:
                return max(1, int(v))
    except Exception:
        pass
    try:
        v = getattr(jax.devices()[0], "num_cores", None)
        if v:
            return max(1, int(v))
    except Exception:
        pass
    return 1  # safe default: do not force extra grid splits on single-TC chips


def _choose_tiles(S, B, D, itemsize, pack, vmem_cap, num_cores):
    """Pick (tile_s, tile_b), sized from padded (sublane/lane) bytes."""
    d_pad = _round_up(D, 128)
    b_pad = _round_up(B, pack)
    row = b_pad * d_pad * itemsize                     # one seq position of x, padded
    total = S * row

    # Per-step x-tile byte target: amortizes the ~0.35us/step overhead while
    # leaving room to double-buffer in scoped VMEM.
    target = min(8 << 20, max(1 << 20, vmem_cap // 12))

    # Enough steps for DMA/compute overlap and multi-TC sharding, but never split
    # a tensor that already fits one small tile (v5e/v6e short sequences).
    want_steps = 1
    if total > (2 << 20):
        want_steps = max(4, 4 * num_cores)             # >= 4 steps per TensorCore
        target = min(target, max(512 << 10, total // want_steps))

    # Batch tiling only when one sequence position is too big for the target or
    # the sequence axis alone cannot supply enough grid steps.
    tile_b = B
    if B > pack and (row > target or S < want_steps):
        by_bytes = (target // (d_pad * itemsize)) // pack * pack
        tile_b = max(pack, min(by_bytes, (B // pack) * pack))
        if tile_b >= B:
            tile_b = B
        row = _round_up(tile_b, pack) * d_pad * itemsize

    tile_s = max(1, min(S, target // max(1, row)))
    if tile_s >= 8:
        tile_s -= tile_s % 8
    return tile_s, tile_b


# ---------------------------------------------------------------------------
# Forward
# ---------------------------------------------------------------------------

def positional_encoding_forward(
    x: jax.Array,
    pe: jax.Array,
    *,
    dropout_p: float = 0.0,
    training: bool = False,
    seed: int = 0,
    tile_s: int | None = None,
    tile_b: int | None = None,
    in_place: bool = False,
):
    """x: [seq_len, batch, d_model]; pe: [max_len, 1, d_model] (or [max_len, d_model]).

    Returns dropout(x + pe[:seq_len]); dropout is identity unless training=True.
    `in_place=True` only when the caller donates x (e.g. jit donate_argnums);
    aliasing without donation makes XLA insert a defensive copy of x.
    """
    S, B, D = x.shape
    if pe.ndim == 2:
        pe = pe[:, None, :]
    assert pe.shape[0] >= S and pe.shape[2] == D, "pe table too small / wrong d_model"
    if pe.dtype != x.dtype:
        # Prefer make_pe_table(..., dtype=x.dtype) at init so this per-call
        # convert (an extra XLA pass over the table) never runs.
        pe = pe.astype(x.dtype)

    use_dropout = bool(training) and float(dropout_p) > 0.0
    if use_dropout:
        assert 0.0 < dropout_p < 1.0, "dropout_p must be in (0, 1) when training"
        if jax.default_backend() != "tpu":
            # TODO(synk): pltpu.prng_* lowers only on real TPUs; portable fallback.
            y = (x + pe[:S]).astype(x.dtype)
            keep = jax.random.bernoulli(jax.random.PRNGKey(seed), 1.0 - dropout_p, y.shape)
            scale = jnp.asarray(1.0 / (1.0 - dropout_p), x.dtype)
            return jnp.where(keep, y * scale, jnp.zeros_like(y))

    itemsize = jnp.dtype(x.dtype).itemsize
    pack = _sublane_pack(x.dtype)
    vmem_cap = _vmem_capacity_bytes()
    num_cores = _num_tensorcores()
    d_pad = _round_up(D, 128)

    ts_auto, tb_auto = _choose_tiles(S, B, D, itemsize, pack, vmem_cap, num_cores)
    ts = int(tile_s) if tile_s is not None else ts_auto
    ts = max(1, min(ts, S))
    tb = int(tile_b) if tile_b is not None else tb_auto
    tb = max(1, min(tb, B))
    if tb < B and tb % 8 != 0:                 # (8,128) rule: block sublane dim multiple of 8
        tb = min(B, _round_up(tb, 8))

    lane_dense_2d = (B == 1)                   # squeeze batch: (S, D) blocks, zero sublane waste
    # TODO(synk): for 2 <= B < pack a lane-dense (S, B*D) view with an in-kernel pe
    # broadcast would remove the remaining sublane padding; the padding is VMEM-only
    # (DMA moves real bytes), so here it is only accounted for honestly below.

    if lane_dense_2d and ts < S:
        ts = min(S, max(8, ts - ts % 8))       # (ts, D) block: ts multiple of 8 or == S

    def _tile_bytes(ts_, tb_):
        if lane_dense_2d:
            xb = _round_up(ts_, pack) * d_pad * itemsize
            return xb, xb
        xb = ts_ * _round_up(tb_, pack) * d_pad * itemsize
        pb = ts_ * pack * d_pad * itemsize     # pe's middle dim of 1 pads to a sublane group
        return xb, pb

    x_tile_bytes, pe_tile_bytes = _tile_bytes(ts, tb)
    needed = 4 * x_tile_bytes + 2 * pe_tile_bytes + (2 << 20)   # dbl-buffered in + out + pe + slack
    ts_floor = 8 if (lane_dense_2d and S > 8) else 1
    while needed > int(0.9 * vmem_cap) and ts > ts_floor:
        ts = max(ts_floor, ts // 2)            # shrink the tile; never under-declare the limit
        if lane_dense_2d and ts < S and ts % 8:
            ts = max(8, ts - ts % 8)
        x_tile_bytes, pe_tile_bytes = _tile_bytes(ts, tb)
        needed = 4 * x_tile_bytes + 2 * pe_tile_bytes + (2 << 20)
    vmem_limit = int(min(max(needed, 16 << 20), int(0.9 * vmem_cap)))

    if lane_dense_2d:
        grid = (pl.cdiv(S, ts),)
        x_spec = pl.BlockSpec((ts, D), lambda i, *_: (i, 0))
        pe_spec = pl.BlockSpec((ts, D), lambda i, *_: (i, 0))
        o_spec = pl.BlockSpec((ts, D), lambda i, *_: (i, 0))
        out_shape = jax.ShapeDtypeStruct((S, D), x.dtype)
        x_in, pe_in = x.reshape(S, D), pe.reshape(pe.shape[0], D)   # free reshapes
    else:
        grid = (pl.cdiv(S, ts), pl.cdiv(B, tb))
        x_spec = pl.BlockSpec((ts, tb, D), lambda i, j, *_: (i, j, 0))
        # pe block index ignores j: Pallas re-DMAs it only when the seq tile changes.
        pe_spec = pl.BlockSpec((ts, 1, D), lambda i, j, *_: (i, 0, 0))
        o_spec = pl.BlockSpec((ts, tb, D), lambda i, j, *_: (i, j, 0))
        out_shape = jax.ShapeDtypeStruct((S, B, D), x.dtype)
        x_in, pe_in = x, pe

    compiler_params = pltpu.CompilerParams(
        dimension_semantics=("parallel",) * len(grid),
        vmem_limit_bytes=vmem_limit,
    )

    if not use_dropout:
        grid_spec = pltpu.PrefetchScalarGridSpec(
            num_scalar_prefetch=0, grid=grid,
            in_specs=[x_spec, pe_spec], out_specs=o_spec)
        out = pl.pallas_call(
            _pe_add_kernel,
            out_shape=out_shape,
            grid_spec=grid_spec,
            compiler_params=compiler_params,
            input_output_aliases={0: 0} if in_place else {},
        )(x_in, pe_in)
    else:
        seed_arr = jnp.asarray([seed], dtype=jnp.int32)
        kernel = functools.partial(
            _pe_add_dropout_kernel, p=float(dropout_p), grid_rank=len(grid))
        grid_spec = pltpu.PrefetchScalarGridSpec(
            num_scalar_prefetch=1,             # seed lands in SMEM
            grid=grid,
            in_specs=[x_spec, pe_spec], out_specs=o_spec)
        out = pl.pallas_call(
            kernel,
            out_shape=out_shape,
            grid_spec=grid_spec,
            compiler_params=compiler_params,
            input_output_aliases={1: 0} if in_place else {},   # x is operand 1 after the seed
        )(seed_arr, x_in, pe_in)

    return out.reshape(S, B, D)


# ---------------------------------------------------------------------------
# Self-test (eval-mode forward: dropout is identity, as in model.eval())
# ---------------------------------------------------------------------------

if __name__ == "__main__":
    def ref_forward(x, pe):
        return x + pe[: x.shape[0]].astype(x.dtype)

    max_len, d_model = 64, 32
    pe = make_pe_table(d_model, max_len, dtype=jnp.float32)       # (max_len, 1, d_model)

    # 1) Small batch (B < sublane pack) -> 3-D path, single tile.
    x = jax.random.normal(jax.random.PRNGKey(0), (8, 2, d_model), jnp.float32)
    out = jax.block_until_ready(positional_encoding_forward(x, pe))
    assert out.shape == x.shape
    assert jnp.allclose(out, ref_forward(x, pe), atol=1e-6), "mismatch (B=2 path)"

    # 2) Batch of 1 -> lane-dense 2-D path (no sublane padding at all).
    x1 = jax.random.normal(jax.random.PRNGKey(1), (8, 1, d_model), jnp.float32)
    out1 = jax.block_until_ready(positional_encoding_forward(x1, pe))
    assert out1.shape == x1.shape
    assert jnp.allclose(out1, ref_forward(x1, pe), atol=1e-6), "mismatch (B=1 path)"

    # 3) Larger batch with explicit tiles -> exercises the (seq, batch) grid and
    #    the pe-block reuse across the inner batch axis.
    x2 = jax.random.normal(jax.random.PRNGKey(2), (8, 16, d_model), jnp.float32)
    out2 = jax.block_until_ready(
        positional_encoding_forward(x2, pe, tile_s=4, tile_b=8))
    assert out2.shape == x2.shape
    assert jnp.allclose(out2, ref_forward(x2, pe), atol=1e-6), "mismatch (tiled path)"

    # Training-mode fused dropout (TPU hardware PRNG) is implemented but not
    # exercised here: pltpu.prng_* has no CPU/interpret lowering.

    print("KERNEL_OK")
</pallas_src>

<mosaic_0001>
module attributes {stable_mosaic.version = 11 : i64} {
  func.func @_pe_add_kernel(%arg0: i32, %arg1: i32, %arg2: memref<8x2x32xf32, #tpu.memory_space<vmem>>, %arg3: memref<8x1x32xf32, #tpu.memory_space<vmem>>, %arg4: memref<8x2x32xf32, #tpu.memory_space<vmem>>) attributes {dimension_semantics = [#tpu.dimension_semantics<parallel>, #tpu.dimension_semantics<parallel>], iteration_bounds = array<i64: 1, 1>, scalar_prefetch = 0 : i64, scratch_operands = 0 : i64, tpu.core_type = #tpu.core_type<tc>, window_params = [{transform_indices = @transform_0, window_bounds = array<i64: 8, 2, 32>}, {transform_indices = @transform_1, window_bounds = array<i64: 8, 1, 32>}, {transform_indices = @transform_2, window_bounds = array<i64: 8, 2, 32>}]} {
    %c0 = arith.constant 0 : index
    %c0_0 = arith.constant 0 : index
    %c0_1 = arith.constant 0 : index
    %0 = vector.load %arg2[%c0, %c0_0, %c0_1] : memref<8x2x32xf32, #tpu.memory_space<vmem>>, vector<8x2x32xf32>
    %c0_2 = arith.constant 0 : index
    %c0_3 = arith.constant 0 : index
    %c0_4 = arith.constant 0 : index
    %1 = vector.load %arg3[%c0_2, %c0_3, %c0_4] : memref<8x1x32xf32, #tpu.memory_space<vmem>>, vector<8x1x32xf32>
    %2 = vector.broadcast %1 : vector<8x1x32xf32> to vector<8x2x32xf32>
    %3 = arith.addf %0, %2 : vector<8x2x32xf32>
    %c0_5 = arith.constant 0 : index
    %c0_6 = arith.constant 0 : index
    %c0_7 = arith.constant 0 : index
    %4 = vector.load %arg4[%c0_5, %c0_6, %c0_7] : memref<8x2x32xf32, #tpu.memory_space<vmem>>, vector<8x2x32xf32>
    tpu.vector_store %arg4[%c0_5, %c0_6, %c0_7], %3 {strides = array<i32>} : memref<8x2x32xf32, #tpu.memory_space<vmem>>, vector<8x2x32xf32>,
    return
  }
  func.func @transform_0(%arg0: i32, %arg1: i32) -> (i32, i32, i32) {
    %c0_i32 = arith.constant 0 : i32
    %c0_i32_0 = arith.constant 0 : i32
    return %arg0, %arg1, %c0_i32 : i32, i32, i32
  }
  func.func @transform_1(%arg0: i32, %arg1: i32) -> (i32, i32, i32) {
    %c0_i32 = arith.constant 0 : i32
    %c0_i32_0 = arith.constant 0 : i32
    %c0_i32_1 = arith.constant 0 : i32
    return %arg0, %c0_i32, %c0_i32_0 : i32, i32, i32
  }
  func.func @transform_2(%arg0: i32, %arg1: i32) -> (i32, i32, i32) {
    %c0_i32 = arith.constant 0 : i32
    %c0_i32_0 = arith.constant 0 : i32
    return %arg0, %arg1, %c0_i32 : i32, i32, i32
  }
}

</mosaic_0001>

<llo_original>
// kernel: tpu_custom_call.1
$region0: #{tpu_custom_call.1}
  #allocation0 [shape = 'u32[]', space=smem, size = 0x4, offset = 0x4, fixed_abs, tag = 'smem constant byte address 0x4 - core index']
  #allocation1 [shape = 'u32[144,128]{1,0:T(1,128)}', space=vmem, size = 0x12000, scoped, tag = 'internal scratch']
  %s0 = inlined_call_operand.vmem [shape: f32[8,2,32], index: 0, kind: input, shape index: {}]
  %s1 = inlined_call_operand.vmem [shape: f32[64,1,32], index: 1, kind: input, shape index: {}]
  %s2 = inlined_call_operand.hbm [shape: f32[8,2,32], index: 2, kind: output, shape index: {}]
  %s3 = sld [smem:[#allocation0]]
  $region18: #{tpu_custom_call.1} parent=0
    _
  %s5 = ssub.s32 1, %s3
  %s6 = scalar_select 0, %s5, %s3
  $region1: #{tpu_custom_call.1} parent=0
    #allocation2 [shape = 'u8[8192]{0}', space=vmem, size = 0x2000, scoped, tag = 'output window, operand 0, single buffered']
    #allocation3 [shape = 's32[1]{0}', space=sflag, size = 0x4, scoped, tag = 'scoped memory for tpu_custom_call.1']
    %7 = vsyncpa [#allocation3], 0
    // Predicated region
    $region2: #{tpu_custom_call.1} parent=1 // pred_check
      _
    $region3: #{tpu_custom_call.1} parent=1 // pred_check_branch
      %9 = sbr.rel (0) target = $region5
    $region4: #{tpu_custom_call.1} parent=1 // pred_region
      _
    $region5: #{tpu_custom_call.1} parent=1 // pred_fallthru
      _
    // Predicated region
    $region6: #{tpu_custom_call.1} parent=1 // pred_check
      _
    $region7: #{tpu_custom_call.1} parent=1 // pred_check_branch
      %11 = sbr.rel (0) target = $region9
    $region8: #{tpu_custom_call.1} parent=1 // pred_region
      _
    $region9: #{tpu_custom_call.1} parent=1 // pred_fallthru
      _
    %v12 = vld [vmem:[%s0] sm:$0x3]
    %v13 = vld [vmem:[%s0 + $0x2] sm:$0x3]
    %v14 = vld [vmem:[%s0 + $0x4] sm:$0x3]
    %v15 = vld [vmem:[%s0 + $0x6] sm:$0x3]
    %v16 = vld [vmem:[%s0 + $0x8] sm:$0x3]
    %v17 = vld [vmem:[%s0 + $0xa] sm:$0x3]
    %v18 = vld [vmem:[%s0 + $0xc] sm:$0x3]
    %v19 = vld [vmem:[%s0 + $0xe] sm:$0x3]
    %v20 = vld [vmem:[%s1] sm:$0x1]
    %v21 = vld [vmem:[%s1 + $0x1] sm:$0x1]
    %v22 = vld [vmem:[%s1 + $0x2] sm:$0x1]
    %v23 = vld [vmem:[%s1 + $0x3] sm:$0x1]
    %v24 = vld [vmem:[%s1 + $0x4] sm:$0x1]
    %v25 = vld [vmem:[%s1 + $0x5] sm:$0x1]
    %v26 = vld [vmem:[%s1 + $0x6] sm:$0x1]
    %v27 = vld [vmem:[%s1 + $0x7] sm:$0x1]
    %v36 = vlaneseq
    %v37 = vshrl.u32 %v36, 7
    %v38 = vsub.s32 0, %v37
    %v39 = vrot.slane %v20, %v38
    %v40 = vlaneseq
    %v41 = vshrl.u32 %v40, 7
    %v42 = vsub.s32 0, %v41
    %v43 = vrot.slane %v21, %v42
    %v44 = vlaneseq
    %v45 = vshrl.u32 %v44, 7
    %v46 = vsub.s32 0, %v45
    %v47 = vrot.slane %v22, %v46
    %v48 = vlaneseq
    %v49 = vshrl.u32 %v48, 7
    %v50 = vsub.s32 0, %v49
    %v51 = vrot.slane %v23, %v50
    %v52 = vlaneseq
    %v53 = vshrl.u32 %v52, 7
    %v54 = vsub.s32 0, %v53
    %v55 = vrot.slane %v24, %v54
    %v56 = vlaneseq
    %v57 = vshrl.u32 %v56, 7
    %v58 = vsub.s32 0, %v57
    %v59 = vrot.slane %v25, %v58
    %v60 = vlaneseq
    %v61 = vshrl.u32 %v60, 7
    %v62 = vsub.s32 0, %v61
    %v63 = vrot.slane %v26, %v62
    %v64 = vlaneseq
    %v65 = vshrl.u32 %v64, 7
    %v66 = vsub.s32 0, %v65
    %v67 = vrot.slane %v27, %v66
    %v76 = vadd.f32 %v12, %v39
    %v77 = vadd.f32 %v13, %v43
    %v78 = vadd.f32 %v14, %v47
    %v79 = vadd.f32 %v15, %v51
    %v80 = vadd.f32 %v16, %v55
    %v81 = vadd.f32 %v17, %v59
    %v82 = vadd.f32 %v18, %v63
    %v83 = vadd.f32 %v19, %v67
    %vm84 = vcmask 254976
    %85 = vst.msk [vmem:[#allocation2] sm:$0x3] %vm84, %v76
    %86 = vst.msk [vmem:[#allocation2 + $0x2] sm:$0x3] %vm84, %v77
    %87 = vst.msk [vmem:[#allocation2 + $0x4] sm:$0x3] %vm84, %v78
    %88 = vst.msk [vmem:[#allocation2 + $0x6] sm:$0x3] %vm84, %v79
    %89 = vst.msk [vmem:[#allocation2 + $0x8] sm:$0x3] %vm84, %v80
    %90 = vst.msk [vmem:[#allocation2 + $0xa] sm:$0x3] %vm84, %v81
    %91 = vst.msk [vmem:[#allocation2 + $0xc] sm:$0x3] %vm84, %v82
    %92 = vst.msk [vmem:[#allocation2 + $0xe] sm:$0x3] %vm84, %v83
    // Predicated region
    $region10: #{tpu_custom_call.1} parent=1 // pred_check
      _
    $region11: #{tpu_custom_call.1} parent=1 // pred_check_branch
      %94 = sbr.rel (0) target = $region13
    $region12: #{tpu_custom_call.1} parent=1 // pred_region
      %s96 = ssub.s32 256, 256
      %97 = vsyncadd [#allocation3], %s96
      %s98 = sshll.u32 [#allocation2], 4
      %s99 = int_to_ptr.vmem [resolvable:$true] %s98
      %104 = dma.vmem_to_hbm [thread:$0]  %s99, 256, %s2, [#allocation3], 32, 32, 2
    $region13: #{tpu_custom_call.1} parent=1 // pred_fallthru
      _
    // Predicated region
    $region14: #{tpu_custom_call.1} parent=1 // pred_check
      _
    $region15: #{tpu_custom_call.1} parent=1 // pred_check_branch
      %106 = sbr.rel (0) target = $region17
    $region16: #{tpu_custom_call.1} parent=1 // pred_region
      %107 = dma.done [#allocation3], 256
    $region17: #{tpu_custom_call.1} parent=1 // pred_fallthru
      _
    %108 = vsyncpa [#allocation3], 1

</llo_original>
